<compile_context>
chip_gen: v6e
topology: v6e:2x2x1
jax: 0.10.0
libtpu: 0.0.40
codegen_flags: <defaults>
</compile_context>

<pallas_src>
import jax
import jax.numpy as jnp
from jax.experimental import pallas as pl
from jax.experimental.pallas import tpu as pltpu

FEATURES = 5
LANE = 128          # lane width: pad feature dims so stores are full vst
SUBLANE = 8         # f32 sublane granularity
MAX_ROW_TILE = 512  # rows per batch block once B scales (near-HBM-roofline)


def _linear_kernel(x_ref, wt_ref, o_ref):
    # x_ref: (row_tile, K_pad), wt_ref: (K_pad, N_pad) -- weight arrives
    # already transposed + padded, so the MXU consumes it directly.
    o_ref[...] = jnp.dot(
        x_ref[...], wt_ref[...], preferred_element_type=jnp.float32
    ).astype(o_ref.dtype)


def _round_up(x: int, m: int) -> int:
    return (x + m - 1) // m * m


def simple_net_forward(batch: jax.Array, weight: jax.Array) -> jax.Array:
    """SimpleNet forward: y = batch @ weight.T (PyTorch Linear, no bias)."""
    b, f_in = batch.shape
    f_out = weight.shape[0]

    # Lane-dense padding of the contraction / output feature dims.
    k_pad = _round_up(f_in, LANE)
    n_pad = _round_up(f_out, LANE)

    # Batch tiling: big tiles when B is large, minimal padding when tiny.
    row_tile = min(MAX_ROW_TILE, _round_up(b, SUBLANE))
    b_pad = _round_up(b, row_tile)

    x_pad = jnp.zeros((b_pad, k_pad), batch.dtype).at[:b, :f_in].set(batch)
    # One-time transpose in the wrapper (constant across calls): y = x @ W.T.
    wt_pad = (
        jnp.zeros((k_pad, n_pad), weight.dtype).at[:f_in, :f_out].set(weight.T)
    )

    cost = pl.CostEstimate(
        flops=2 * b * f_in * f_out,
        transcendentals=0,
        bytes_accessed=(b * f_in + f_in * f_out + b * f_out)
        * batch.dtype.itemsize,
    )

    out_pad = pl.pallas_call(
        _linear_kernel,
        out_shape=jax.ShapeDtypeStruct((b_pad, n_pad), batch.dtype),
        grid=(b_pad // row_tile,),
        in_specs=[
            pl.BlockSpec((row_tile, k_pad), lambda i: (i, 0)),
            pl.BlockSpec((k_pad, n_pad), lambda i: (0, 0)),
        ],
        out_specs=pl.BlockSpec((row_tile, n_pad), lambda i: (i, 0)),
        compiler_params=pltpu.CompilerParams(
            dimension_semantics=("parallel",),
        ),
        cost_estimate=cost,
    )(x_pad, wt_pad)

    return out_pad[:b, :f_out]


if __name__ == "__main__":
    # Deterministic parameter init, exactly as in SimpleNet.__init__:
    # weight = 2.0 * eye(5)
    weight = 2.0 * jnp.eye(FEATURES, dtype=jnp.float32)

    # Deterministic small input: batch of 8 vectors of length 5.
    key = jax.random.PRNGKey(0)
    x = jax.random.normal(key, (8, FEATURES), dtype=jnp.float32)

    y = simple_net_forward(x, weight)
    y = jax.block_until_ready(y)

    # Reference check: SimpleNet multiplies the input by 2.
    expected = x @ weight.T
    assert y.shape == x.shape
    assert jnp.allclose(y, expected, atol=1e-6), "mismatch vs reference"
    assert jnp.allclose(y, 2.0 * x, atol=1e-6), "output should be 2 * input"

    print("KERNEL_OK")
</pallas_src>

<mosaic_0001>
module attributes {stable_mosaic.version = 11 : i64} {
  func.func @_linear_kernel(%arg0: i32, %arg1: memref<8x128xf32, #tpu.memory_space<vmem>>, %arg2: memref<128x128xf32, #tpu.memory_space<vmem>>, %arg3: memref<8x128xf32, #tpu.memory_space<vmem>>) attributes {dimension_semantics = [#tpu.dimension_semantics<parallel>], iteration_bounds = array<i64: 1>, scalar_prefetch = 0 : i64, scratch_operands = 0 : i64, tpu.core_type = #tpu.core_type<tc>, window_params = [{transform_indices = @transform_0, window_bounds = array<i64: 8, 128>}, {pipeline_mode = #tpu.pipeline_mode<synchronous>, transform_indices = @transform_1, window_bounds = array<i64: 128, 128>}, {transform_indices = @transform_2, window_bounds = array<i64: 8, 128>}]} {
    %c0 = arith.constant 0 : index
    %c0_0 = arith.constant 0 : index
    %0 = vector.load %arg1[%c0, %c0_0] : memref<8x128xf32, #tpu.memory_space<vmem>>, vector<8x128xf32>
    %c0_1 = arith.constant 0 : index
    %c0_2 = arith.constant 0 : index
    %1 = vector.load %arg2[%c0_1, %c0_2] : memref<128x128xf32, #tpu.memory_space<vmem>>, vector<128x128xf32>
    %cst = arith.constant dense<0.000000e+00> : vector<8x128xf32>
    %2 = tpu.matmul %0, %1, %cst {dimension_numbers = #tpu.dot_dimension_numbers<[1], [0], [0], [1], [0, 0, 1, 1], [], []>} : vector<8x128xf32>, vector<128x128xf32>, vector<8x128xf32> -> vector<8x128xf32>
    %c0_3 = arith.constant 0 : index
    %c0_4 = arith.constant 0 : index
    %3 = vector.load %arg3[%c0_3, %c0_4] : memref<8x128xf32, #tpu.memory_space<vmem>>, vector<8x128xf32>
    tpu.vector_store %arg3[%c0_3, %c0_4], %2 {strides = array<i32>} : memref<8x128xf32, #tpu.memory_space<vmem>>, vector<8x128xf32>,
    return
  }
  func.func @transform_0(%arg0: i32) -> (i32, i32) {
    %c0_i32 = arith.constant 0 : i32
    %c0_i32_0 = arith.constant 0 : i32
    return %arg0, %c0_i32 : i32, i32
  }
  func.func @transform_1(%arg0: i32) -> (i32, i32) {
    %c0_i32 = arith.constant 0 : i32
    %c0_i32_0 = arith.constant 0 : i32
    %c0_i32_1 = arith.constant 0 : i32
    return %c0_i32, %c0_i32_0 : i32, i32
  }
  func.func @transform_2(%arg0: i32) -> (i32, i32) {
    %c0_i32 = arith.constant 0 : i32
    %c0_i32_0 = arith.constant 0 : i32
    return %arg0, %c0_i32 : i32, i32
  }
}

</mosaic_0001>

<llo_original>
// kernel: tpu_custom_call.1
$region0: #{tpu_custom_call.1}
  #allocation0 [shape = 'u32[]', space=smem, size = 0x4, offset = 0x4, fixed_abs, tag = 'smem constant byte address 0x4 - core index']
  #allocation1 [shape = 'u32[144,128]{1,0:T(1,128)}', space=vmem, size = 0x12000, scoped, tag = 'internal scratch']
  %s0 = inlined_call_operand.hbm [shape: f32[8,128], index: 0, kind: input, shape index: {}]
  %s1 = inlined_call_operand.hbm [shape: f32[128,128], index: 1, kind: input, shape index: {}]
  %s2 = inlined_call_operand.hbm [shape: f32[8,128], index: 2, kind: output, shape index: {}]
  %s3 = sld [smem:[#allocation0]]
  $region26: #{tpu_custom_call.1} parent=0
    _
  %s5 = ssub.s32 1, %s3
  %s6 = scalar_select 0, %s5, %s3
  $region1: #{tpu_custom_call.1} parent=0
    #allocation2 [shape = 'u8[4096]{0}', space=vmem, size = 0x1000, scoped, tag = 'input window, operand 0, single buffered']
    #allocation3 [shape = 's32[1]{0}', space=sflag, size = 0x4, scoped, tag = 'scoped memory for tpu_custom_call.1']
    #allocation4 [shape = 's32[1]{0}', space=sflag, size = 0x4, scoped, tag = 'scoped memory for tpu_custom_call.1']
    #allocation5 [shape = 'u8[65536]{0}', space=vmem, size = 0x10000, scoped, tag = 'input window, operand 1, single buffered']
    #allocation6 [shape = 's32[1]{0}', space=sflag, size = 0x4, scoped, tag = 'scoped memory for tpu_custom_call.1']
    #allocation7 [shape = 'u8[4096]{0}', space=vmem, size = 0x1000, scoped, tag = 'output window, operand 0, single buffered']
    %7 = vsyncpa [#allocation3], 0
    %8 = vsyncpa [#allocation6], 0
    %9 = vsyncpa [#allocation4], 0
    // Predicated region
    $region2: #{tpu_custom_call.1} parent=1 // pred_check
      _
    $region3: #{tpu_custom_call.1} parent=1 // pred_check_branch
      %11 = sbr.rel (0) target = $region5
    $region4: #{tpu_custom_call.1} parent=1 // pred_region
      %s13 = ssub.s32 128, 128
      %14 = vsyncadd [#allocation3], %s13
      %s16 = sshll.u32 [#allocation2], 4
      %s17 = int_to_ptr.vmem [resolvable:$true] %s16
      %19 = dma.hbm_to_vmem [thread:$0]  %s0, 128, %s17, [#allocation3]
    $region5: #{tpu_custom_call.1} parent=1 // pred_fallthru
      _
    // Predicated region
    $region6: #{tpu_custom_call.1} parent=1 // pred_check
      _
    $region7: #{tpu_custom_call.1} parent=1 // pred_check_branch
      %21 = sbr.rel (0) target = $region9
    $region8: #{tpu_custom_call.1} parent=1 // pred_region
      %s23 = ssub.s32 2048, 2048
      %24 = vsyncadd [#allocation6], %s23
      %s25 = sshll.u32 [#allocation5], 4
      %s26 = int_to_ptr.vmem [resolvable:$true] %s25
      %31 = dma.hbm_to_vmem [thread:$0]  %s1, 2048, %s26, [#allocation6], 128, 128, 8
    $region9: #{tpu_custom_call.1} parent=1 // pred_fallthru
      _
    // Predicated region
    $region10: #{tpu_custom_call.1} parent=1 // pred_check
      _
    $region11: #{tpu_custom_call.1} parent=1 // pred_check_branch
      %33 = sbr.rel (0) target = $region13
    $region12: #{tpu_custom_call.1} parent=1 // pred_region
      %34 = dma.done [#allocation3], 128
    $region13: #{tpu_custom_call.1} parent=1 // pred_fallthru
      _
    // Predicated region
    $region14: #{tpu_custom_call.1} parent=1 // pred_check
      _
    $region15: #{tpu_custom_call.1} parent=1 // pred_check_branch
      %36 = sbr.rel (0) target = $region17
    $region16: #{tpu_custom_call.1} parent=1 // pred_region
      %37 = dma.done [#allocation6], 2048
    $region17: #{tpu_custom_call.1} parent=1 // pred_fallthru
      _
    %v38 = vld [vmem:[#allocation2] sm:$0xff]
    %v39 = vld [vmem:[#allocation5] sm:$0xff]
    %v40 = vld [vmem:[#allocation5 + $0x8] sm:$0xff]
    %v41 = vld [vmem:[#allocation5 + $0x10] sm:$0xff]
    %v42 = vld [vmem:[#allocation5 + $0x18] sm:$0xff]
    %v43 = vld [vmem:[#allocation5 + $0x20] sm:$0xff]
    %v44 = vld [vmem:[#allocation5 + $0x28] sm:$0xff]
    %v45 = vld [vmem:[#allocation5 + $0x30] sm:$0xff]
    %v46 = vld [vmem:[#allocation5 + $0x38] sm:$0xff]
    %v47 = vld [vmem:[#allocation5 + $0x40] sm:$0xff]
    %v48 = vld [vmem:[#allocation5 + $0x48] sm:$0xff]
    %v49 = vld [vmem:[#allocation5 + $0x50] sm:$0xff]
    %v50 = vld [vmem:[#allocation5 + $0x58] sm:$0xff]
    %v51 = vld [vmem:[#allocation5 + $0x60] sm:$0xff]
    %v52 = vld [vmem:[#allocation5 + $0x68] sm:$0xff]
    %v53 = vld [vmem:[#allocation5 + $0x70] sm:$0xff]
    %v54 = vld [vmem:[#allocation5 + $0x78] sm:$0xff]
    %55 = vmatprep.subr.mxu0 0.0
    %56 = vmatpush1.msra.mxu0 %v54
    %57 = vmatprep.subr.mxu0 0.0
    %58 = vmatpush1.msra.mxu0 %v53
    %59 = vmatprep.subr.mxu0 0.0
    %60 = vmatpush1.msra.mxu0 %v52
    %61 = vmatprep.subr.mxu0 0.0
    %62 = vmatpush1.msra.mxu0 %v51
    %63 = vmatprep.subr.mxu0 0.0
    %64 = vmatpush1.msra.mxu0 %v50
    %65 = vmatprep.subr.mxu0 0.0
    %66 = vmatpush1.msra.mxu0 %v49
    %67 = vmatprep.subr.mxu0 0.0
    %68 = vmatpush1.msra.mxu0 %v48
    %69 = vmatprep.subr.mxu0 0.0
    %70 = vmatpush1.msra.mxu0 %v47
    %71 = vmatprep.subr.mxu0 0.0
    %72 = vmatpush1.msra.mxu0 %v46
    %73 = vmatprep.subr.mxu0 0.0
    %74 = vmatpush1.msra.mxu0 %v45
    %75 = vmatprep.subr.mxu0 0.0
    %76 = vmatpush1.msra.mxu0 %v44
    %77 = vmatprep.subr.mxu0 0.0
    %78 = vmatpush1.msra.mxu0 %v43
    %79 = vmatprep.subr.mxu0 0.0
    %80 = vmatpush1.msra.mxu0 %v42
    %81 = vmatprep.subr.mxu0 0.0
    %82 = vmatpush1.msra.mxu0 %v41
    %83 = vmatprep.subr.mxu0 0.0
    %84 = vmatpush1.msra.mxu0 %v40
    %85 = vmatprep.subr.mxu0 0.0
    %86 = vmatpush1.msra.mxu0 %v39
    %87 = vmatprep.subr.mxu0 0.0
    %88 = vmatpush2.msra.mxu0 0.0
    %89 = vmatprep.subr.mxu0 0.0
    %90 = vmatpush2.msra.mxu0 0.0
    %91 = vmatprep.subr.mxu0 0.0
    %92 = vmatpush2.msra.mxu0 0.0
    %93 = vmatprep.subr.mxu0 0.0
    %94 = vmatpush2.msra.mxu0 0.0
    %95 = vmatprep.subr.mxu0 0.0
    %96 = vmatpush2.msra.mxu0 0.0
    %97 = vmatprep.subr.mxu0 0.0
    %98 = vmatpush2.msra.mxu0 0.0
    %99 = vmatprep.subr.mxu0 0.0
    %100 = vmatpush2.msra.mxu0 0.0
    %101 = vmatprep.subr.mxu0 0.0
    %102 = vmatpush2.msra.mxu0 0.0
    %103 = vmatprep.subr.mxu0 0.0
    %104 = vmatpush2.msra.mxu0 0.0
    %105 = vmatprep.subr.mxu0 0.0
    %106 = vmatpush2.msra.mxu0 0.0
    %107 = vmatprep.subr.mxu0 0.0
    %108 = vmatpush2.msra.mxu0 0.0
    %109 = vmatprep.subr.mxu0 0.0
    %110 = vmatpush2.msra.mxu0 0.0
    %111 = vmatprep.subr.mxu0 0.0
    %112 = vmatpush2.msra.mxu0 0.0
    %113 = vmatprep.subr.mxu0 0.0
    %114 = vmatpush2.msra.mxu0 0.0
    %115 = vmatprep.subr.mxu0 0.0
    %116 = vmatpush2.msra.mxu0 0.0
    %117 = vmatprep.subr.mxu0 0.0
    %118 = vmatpush2.msra.mxu0 0.0
    %119 = vmatprep.mubr.f32.mxu0 0.0
    %120 = vmatmul.mubr.f32.gmra.mxu0 %v38
    %v121 = vpop.f32.mrf.mxu0
    %v122 = vadd.f32 0.0, %v121
    %v123 = vpop.f32.mrf.mxu0
    %124 = vdwg.mxu0
    %125 = vst [vmem:[#allocation7] sm:$0xff] %v122
    // Predicated region
    $region18: #{tpu_custom_call.1} parent=1 // pred_check
      _
    $region19: #{tpu_custom_call.1} parent=1 // pred_check_branch
      %127 = sbr.rel (0) target = $region21
    $region20: #{tpu_custom_call.1} parent=1 // pred_region
      %s129 = ssub.s32 128, 128
      %130 = vsyncadd [#allocation4], %s129
      %s132 = sshll.u32 [#allocation7], 4
      %s133 = int_to_ptr.vmem [resolvable:$true] %s132
      %135 = dma.vmem_to_hbm [thread:$0]  %s133, 128, %s2, [#allocation4]
    $region21: #{tpu_custom_call.1} parent=1 // pred_fallthru
      _
    // Predicated region
    $region22: #{tpu_custom_call.1} parent=1 // pred_check
      _
    $region23: #{tpu_custom_call.1} parent=1 // pred_check_branch
      %137 = sbr.rel (0) target = $region25
    $region24: #{tpu_custom_call.1} parent=1 // pred_region
      %138 = dma.done [#allocation4], 128
    $region25: #{tpu_custom_call.1} parent=1 // pred_fallthru
      _
    %139 = vsyncpa [#allocation3], 1
    %140 = vsyncpa [#allocation6], 1
    %141 = vsyncpa [#allocation4], 1

</llo_original>
